<compile_context>
chip_gen: v5e
topology: v5e:2x2
jax: 0.10.0
libtpu: 0.0.40
codegen_flags: <defaults>
</compile_context>

<pallas_src>
import functools

import jax
import jax.numpy as jnp
from jax.experimental import pallas as pl
from jax.experimental.pallas import tpu as pltpu


# ---------------------------------------------------------------------------
# B == 1 path: single state -> scalar action index (module's exact forward)
# ---------------------------------------------------------------------------
def _act_single_kernel(state_ref, w_ref, action_ref):
    # state_ref : (1, S)  f32 VMEM
    # w_ref     : (A, S)  f32 VMEM   (torch nn.Linear storage, no transpose)
    # action_ref: (1, 1)  i32 SMEM   (scalar argmax index)
    s = state_ref[...]                                   # (1, S)
    w = w_ref[...]                                       # (A, S)

    # VPU broadcast-multiply + XLU lane reduction: logits[a] = sum_k w[a,k]*s[0,k]
    logits = jnp.sum(w * s, axis=-1, keepdims=True)      # (A, 1) f32
    # NaN guard: keep the result in [0, A) even for non-finite inputs.
    logits = jnp.where(jnp.isnan(logits), jnp.float32(-jnp.inf), logits)

    # argmax with first-index tie-break (torch semantics for finite inputs).
    max_val = jnp.max(logits, axis=0, keepdims=True)                 # (1, 1)
    idx = jax.lax.broadcasted_iota(jnp.int32, logits.shape, 0)       # (A, 1)
    masked = jnp.where(logits == max_val, idx, jnp.int32(2 ** 30))   # (A, 1)
    action_ref[0, 0] = jnp.min(masked)                               # scalar


@jax.jit
def actor_discrete_action(state, weight):
    """Action-only forward for a single state.

    Returns a (1, 1) int32 device array (no host sync).
      state : (1, state_dim) f32
      weight: (action_dim, state_dim) f32, torch nn.Linear layout.
    """
    B, state_dim = state.shape
    action_dim, state_dim_w = weight.shape
    assert state_dim == state_dim_w
    assert B == 1  # the PyTorch forward calls .item() (single sample)

    return pl.pallas_call(
        _act_single_kernel,
        out_shape=jax.ShapeDtypeStruct((1, 1), jnp.int32),
        in_specs=[
            pl.BlockSpec(memory_space=pltpu.MemorySpace.VMEM),
            pl.BlockSpec(memory_space=pltpu.MemorySpace.VMEM),
        ],
        out_specs=pl.BlockSpec(memory_space=pltpu.MemorySpace.SMEM),
        cost_estimate=pl.CostEstimate(
            flops=2 * action_dim * state_dim,
            transcendentals=0,
            bytes_accessed=4 * (action_dim * state_dim + state_dim + 1),
        ),
    )(state, weight)


def actor_discrete_forward(state, weight):
    """Mirrors ActorDiscrete.forward(): returns a Python int (the `.item()`).

    NOTE: forces a device->host sync (~10-100 us, >> kernel time).  In hot RL
    loops keep the action on device and/or use the batched variant below.
    """
    return int(actor_discrete_action(state, weight)[0, 0])


# ---------------------------------------------------------------------------
# Batched path: many states -> one action index per row (amortizes launch
# overhead + weight DMA; lane-dense output; parallel grid axis for v7x).
# ---------------------------------------------------------------------------
def _act_batched_kernel(st_ref, w_ref, action_ref):
    # st_ref    : (S, tile_b) f32 VMEM   (states pre-transposed in the wrapper)
    # w_ref     : (A, S)      f32 VMEM   (torch layout; same block every step)
    # action_ref: (1, tile_b) i32 VMEM   (lane-dense action row for this tile)
    logits = jnp.dot(w_ref[...], st_ref[...],
                     preferred_element_type=jnp.float32)             # (A, tile_b)
    logits = jnp.where(jnp.isnan(logits), jnp.float32(-jnp.inf), logits)

    max_val = jnp.max(logits, axis=0, keepdims=True)                 # (1, tile_b)
    idx = jax.lax.broadcasted_iota(jnp.int32, logits.shape, 0)       # (A, tile_b)
    masked = jnp.where(logits == max_val, idx, jnp.int32(2 ** 30))
    action_ref[...] = jnp.min(masked, axis=0, keepdims=True)         # (1, tile_b)


@functools.partial(jax.jit, static_argnames=("tile_b",))
def actor_discrete_actions_batched(states, weight, *, tile_b=128):
    """Batched action selection: states (B, state_dim) -> actions (B,) int32."""
    B, state_dim = states.shape
    action_dim, state_dim_w = weight.shape
    assert state_dim == state_dim_w

    n_tiles = pl.cdiv(B, tile_b)
    b_padded = n_tiles * tile_b
    if b_padded != B:
        # Zero rows give logits == 0 -> argmax 0; sliced off below.
        states = jnp.pad(states, ((0, b_padded - B), (0, 0)))

    # Layout plumbing in the wrapper: batch on the lane axis so both the input
    # tile and the action output are lane-dense (unmasked vector stores).
    states_t = states.T                                  # (S, b_padded)

    actions = pl.pallas_call(
        _act_batched_kernel,
        out_shape=jax.ShapeDtypeStruct((n_tiles, tile_b), jnp.int32),
        grid=(n_tiles,),
        in_specs=[
            pl.BlockSpec((state_dim, tile_b), lambda i: (0, i)),
            pl.BlockSpec((action_dim, state_dim), lambda i: (0, 0)),
        ],
        out_specs=pl.BlockSpec((1, tile_b), lambda i: (i, 0)),
        compiler_params=pltpu.CompilerParams(
            dimension_semantics=("parallel",),
        ),
        cost_estimate=pl.CostEstimate(
            flops=2 * action_dim * state_dim * b_padded,
            transcendentals=0,
            bytes_accessed=4 * (action_dim * state_dim
                                + state_dim * b_padded + b_padded),
        ),
    )(states_t, weight)

    return actions.reshape(b_padded)[:B]


if __name__ == "__main__":
    # Shapes consistent with the module: state_dim=32, action_dim=8.
    state_dim, action_dim = 32, 8

    key = jax.random.PRNGKey(0)
    k_state, k_w, k_batch = jax.random.split(key, 3)

    # Deterministic nn.Linear-style init: U(-1/sqrt(in), 1/sqrt(in)), no bias.
    bound = 1.0 / jnp.sqrt(jnp.float32(state_dim))
    weight = jax.random.uniform(
        k_w, (action_dim, state_dim), dtype=jnp.float32,
        minval=-bound, maxval=bound,
    )

    # --- single-state path (exact module semantics) -----------------------
    state = jax.random.normal(k_state, (1, state_dim), dtype=jnp.float32)
    action = jax.block_until_ready(actor_discrete_action(state, weight))
    ref_action = int(jnp.argmax(state @ weight.T, axis=1)[0])
    assert int(action[0, 0]) == ref_action

    a = actor_discrete_forward(state, weight)  # the `.item()` result
    assert isinstance(a, int) and a == ref_action

    # --- batched path (amortized launch / weight DMA, lane-dense output) --
    B = 200  # deliberately not a multiple of the 128-row tile
    states = jax.random.normal(k_batch, (B, state_dim), dtype=jnp.float32)
    actions = jax.block_until_ready(
        actor_discrete_actions_batched(states, weight))
    ref_actions = jnp.argmax(states @ weight.T, axis=1).astype(jnp.int32)
    assert actions.shape == (B,)
    assert actions.dtype == jnp.int32
    assert bool(jnp.all(actions == ref_actions))

    print("KERNEL_OK")
</pallas_src>

<mosaic_0001>
module attributes {stable_mosaic.version = 11 : i64} {
  func.func @_act_single_kernel(%arg0: memref<1x32xf32, #tpu.memory_space<vmem>>, %arg1: memref<8x32xf32, #tpu.memory_space<vmem>>, %arg2: memref<1x1xi32, #tpu.memory_space<smem>>) attributes {dimension_semantics = [], scalar_prefetch = 0 : i64, scratch_operands = 0 : i64, tpu.core_type = #tpu.core_type<tc>} {
    %c0 = arith.constant 0 : index
    %c0_0 = arith.constant 0 : index
    %0 = vector.load %arg0[%c0, %c0_0] : memref<1x32xf32, #tpu.memory_space<vmem>>, vector<1x32xf32>
    %c0_1 = arith.constant 0 : index
    %c0_2 = arith.constant 0 : index
    %1 = vector.load %arg1[%c0_1, %c0_2] : memref<8x32xf32, #tpu.memory_space<vmem>>, vector<8x32xf32>
    %2 = vector.broadcast %0 : vector<1x32xf32> to vector<8x32xf32>
    %3 = arith.mulf %1, %2 : vector<8x32xf32>
    %cst = arith.constant dense<0.000000e+00> : vector<8xf32>
    %4 = vector.multi_reduction <add>, %3, %cst [1] : vector<8x32xf32> to vector<8xf32>
    %5 = vector.shape_cast %4 : vector<8xf32> to vector<8x1xf32>
    %6 = arith.cmpf one, %5, %5 : vector<8x1xf32>
    %cst_3 = arith.constant 0xFF800000 : f32
    %7 = vector.broadcast %cst_3 : f32 to vector<8x1xf32>
    %8 = arith.select %6, %7, %5 : vector<8x1xi1>, vector<8x1xf32>
    %cst_4 = arith.constant dense<0xFF800000> : vector<1xf32>
    %9 = vector.multi_reduction <maximumf>, %8, %cst_4 [0] : vector<8x1xf32> to vector<1xf32>
    %10 = vector.shape_cast %9 : vector<1xf32> to vector<1x1xf32>
    %11 = tpu.iota {dimensions = array<i32: 0>} : vector<8x1xi32>
    %12 = vector.broadcast %10 : vector<1x1xf32> to vector<8x1xf32>
    %13 = arith.cmpf oeq, %8, %12 : vector<8x1xf32>
    %c1073741824_i32 = arith.constant 1073741824 : i32
    %14 = vector.broadcast %c1073741824_i32 : i32 to vector<8x1xi32>
    %15 = arith.select %13, %11, %14 : vector<8x1xi1>, vector<8x1xi32>
    %16 = vector.shape_cast %15 : vector<8x1xi32> to vector<1x8x1xi32>
    %cst_5 = arith.constant dense<2147483647> : vector<1xi32>
    %17 = vector.multi_reduction <minsi>, %16, %cst_5 [1, 2] : vector<1x8x1xi32> to vector<1xi32>
    %18 = vector.shape_cast %17 : vector<1xi32> to vector<1x1x1xi32>
    %19 = vector.extract %18[0, 0, 0] : i32 from vector<1x1x1xi32>
    %c0_6 = arith.constant 0 : index
    %c0_7 = arith.constant 0 : index
    %20 = memref.load %arg2[%c0_6, %c0_7] : memref<1x1xi32, #tpu.memory_space<smem>>
    memref.store %19, %arg2[%c0_6, %c0_7] : memref<1x1xi32, #tpu.memory_space<smem>>
    return
  }
}

</mosaic_0001>

<llo_original>
// kernel: actor_discrete_action.1
$region0: #{actor_discrete_action.1}
  #allocation0 [shape = 'u32[]', space=smem, size = 0x4, offset = 0x4, fixed_abs, tag = 'smem constant byte address 0x4 - core index']
  #allocation1 [shape = 'u32[72,128]{1,0:T(1,128)}', space=vmem, size = 0x9000, scoped, tag = 'internal scratch']
  %s0 = inlined_call_operand.hbm [shape: f32[1,32], index: 0, kind: input, shape index: {}]
  %s1 = inlined_call_operand.hbm [shape: f32[8,32], index: 1, kind: input, shape index: {}]
  %s2 = inlined_call_operand.hbm [shape: s32[1,1], index: 2, kind: output, shape index: {}]
  %s3 = sld [smem:[#allocation0]]
  $region26: #{actor_discrete_action.1} parent=0
    _
  %s5 = ssub.s32 1, %s3
  %s6 = scalar_select 0, %s5, %s3
  $region1: #{actor_discrete_action.1} parent=0
    #allocation2 [shape = 'u8[512]{0}', space=vmem, size = 0x400, scoped, tag = 'input window, operand 0, single buffered']
    #allocation3 [shape = 's32[1]{0}', space=sflag, size = 0x4, scoped, tag = 'scoped memory for actor_discrete_action.1']
    #allocation4 [shape = 's32[1]{0}', space=sflag, size = 0x4, scoped, tag = 'scoped memory for actor_discrete_action.1']
    #allocation5 [shape = 'u8[4096]{0}', space=vmem, size = 0x1000, scoped, tag = 'input window, operand 1, single buffered']
    #allocation6 [shape = 's32[1]{0}', space=sflag, size = 0x4, scoped, tag = 'scoped memory for actor_discrete_action.1']
    #allocation7 [shape = 'u8[512]{0}', space=smem, size = 0x200, scoped, tag = 'output window, operand 0, single buffered']
    %7 = vsyncpa [#allocation3], 0
    %8 = vsyncpa [#allocation6], 0
    %9 = vsyncpa [#allocation4], 0
    // Predicated region
    $region2: #{actor_discrete_action.1} parent=1 // pred_check
      _
    $region3: #{actor_discrete_action.1} parent=1 // pred_check_branch
      %11 = sbr.rel (0) target = $region5
    $region4: #{actor_discrete_action.1} parent=1 // pred_region
      %13 = vsyncadd [#allocation3], 0
      %s15 = sshll.u32 %s0, 4
      %s16 = int_to_ptr.hbm [resolvable:$true] %s15
      %s17 = sshll.u32 [#allocation2], 4
      %s18 = int_to_ptr.vmem [resolvable:$true] %s17
      %20 = dma.hbm_to_vmem [thread:$0]  %s16, 16, %s18, [#allocation3]
    $region5: #{actor_discrete_action.1} parent=1 // pred_fallthru
      _
    // Predicated region
    $region6: #{actor_discrete_action.1} parent=1 // pred_check
      _
    $region7: #{actor_discrete_action.1} parent=1 // pred_check_branch
      %22 = sbr.rel (0) target = $region9
    $region8: #{actor_discrete_action.1} parent=1 // pred_region
      %24 = vsyncadd [#allocation6], 0
      %s26 = sshll.u32 %s1, 4
      %s27 = int_to_ptr.hbm [resolvable:$true] %s26
      %s28 = sshll.u32 [#allocation5], 4
      %s29 = int_to_ptr.vmem [resolvable:$true] %s28
      %31 = dma.hbm_to_vmem [thread:$0]  %s27, 128, %s29, [#allocation6]
    $region9: #{actor_discrete_action.1} parent=1 // pred_fallthru
      _
    // Predicated region
    $region10: #{actor_discrete_action.1} parent=1 // pred_check
      _
    $region11: #{actor_discrete_action.1} parent=1 // pred_check_branch
      %33 = sbr.rel (0) target = $region13
    $region12: #{actor_discrete_action.1} parent=1 // pred_region
      %35 = dma.done [#allocation3], 16
    $region13: #{actor_discrete_action.1} parent=1 // pred_fallthru
      _
    // Predicated region
    $region14: #{actor_discrete_action.1} parent=1 // pred_check
      _
    $region15: #{actor_discrete_action.1} parent=1 // pred_check_branch
      %37 = sbr.rel (0) target = $region17
    $region16: #{actor_discrete_action.1} parent=1 // pred_region
      %39 = dma.done [#allocation6], 128
    $region17: #{actor_discrete_action.1} parent=1 // pred_fallthru
      _
    %v40 = vld [vmem:[#allocation2] sm:$0x1]
    %v41 = vld [vmem:[#allocation5] sm:$0xff]
    %v43 = vperm.slane %v40, 0
    %v45 = vmul.f32 %v41, %v43
    %vm46 = vcmask 261120
    %v47 = vsel %vm46, %v45, 0.0
    %48 = vadd.xlane.f32.xlu0 %v47
    %v49 = vpop.xlane.xlu0 %48
    %vm50 = vcmp.ne.f32.partialorder %v49, %v49
    %v51 = vsel %vm50, -inf, %v49
    %v52 = vrot.slane %v51, 4
    %v53 = vmax.f32 %v51, %v52
    %v54 = vrot.slane %v53, 2
    %v55 = vmax.f32 %v53, %v54
    %v56 = vrot.slane %v55, 1
    %v57 = vmax.f32 %v55, %v56
    %v58 = vlaneseq
    %v59 = vshrl.u32 %v58, 7
    %vm60 = vcmp.eq.f32.partialorder %v51, %v57
    %v61 = vsel %vm60, %v59, 1073741824
    %v62 = vrot.slane %v61, 4
    %vm63 = vcmp.lt.s32.totalorder %v61, %v62
    %v64 = vsel %vm63, %v61, %v62
    %v65 = vrot.slane %v64, 2
    %vm66 = vcmp.lt.s32.totalorder %v64, %v65
    %v67 = vsel %vm66, %v64, %v65
    %v68 = vrot.slane %v67, 1
    %vm69 = vcmp.lt.s32.totalorder %v67, %v68
    %v70 = vsel %vm69, %v67, %v68
    %s71 = vtos %v70
    %s72 = scalar_lea.smem [#allocation7], 0
    %73 = sst [smem:[%s72]] %s71
    // Predicated region
    $region18: #{actor_discrete_action.1} parent=1 // pred_check
      _
    $region19: #{actor_discrete_action.1} parent=1 // pred_check_branch
      %75 = sbr.rel (0) target = $region21
    $region20: #{actor_discrete_action.1} parent=1 // pred_region
      %77 = vsyncadd [#allocation4], 0
      %s79 = sshll.u32 %s2, 4
      %s80 = int_to_ptr.hbm [resolvable:$true] %s79
      %82 = dma.smem_to_hbm [#allocation7], 16, %s80, [#allocation4]
    $region21: #{actor_discrete_action.1} parent=1 // pred_fallthru
      _
    // Predicated region
    $region22: #{actor_discrete_action.1} parent=1 // pred_check
      _
    $region23: #{actor_discrete_action.1} parent=1 // pred_check_branch
      %84 = sbr.rel (0) target = $region25
    $region24: #{actor_discrete_action.1} parent=1 // pred_region
      %86 = dma.done [#allocation4], 16
    $region25: #{actor_discrete_action.1} parent=1 // pred_fallthru
      _
    %87 = sfence
    %88 = vsyncpa [#allocation3], 1
    %89 = vsyncpa [#allocation6], 1
    %90 = vsyncpa [#allocation4], 1

</llo_original>
